<compile_context>
chip_gen: v5e
topology: v5e:2x2
jax: 0.10.0
libtpu: 0.0.40
codegen_flags: <defaults>
</compile_context>

<pallas_src>
import functools

import jax
import jax.numpy as jnp
from jax.experimental import pallas as pl
from jax.experimental.pallas import tpu as pltpu

_LANE = 128      # lane width (last dim)
_SUBLANE = 8     # f32 sublane packing (second-to-last dim)


def _round_up(x, m):
    return ((x + m - 1) // m) * m


def _dqn_forward_kernel(x_ref, w1_ref, b1_ref, w2_ref, b2_ref, q_ref):
    # x_ref:  [Bt, obs_dim]            (compute dtype: f32 or bf16)
    # w1_ref: [obs_dim, hidden_pad]    b1_ref: [1, hidden_pad]  (f32)
    # w2_ref: [hidden_pad, act_pad]    b2_ref: [1, act_pad]     (f32)
    # q_ref:  [Bt, act_pad]            (f32, lane-dense)
    x = x_ref[...]
    # fc1 (MXU, f32 accumulation) + f32 bias/ReLU epilogue (VPU).
    h = jnp.dot(x, w1_ref[...], preferred_element_type=jnp.float32) + b1_ref[...]
    h = jnp.maximum(h, 0.0)
    # fc2 (MXU, f32 accumulation) + f32 bias.
    q = jnp.dot(h.astype(w2_ref.dtype), w2_ref[...],
                preferred_element_type=jnp.float32) + b2_ref[...]
    q_ref[...] = q.astype(q_ref.dtype)
    # TODO(synk): optionally fuse argmax over Q here for the actor loop so only
    # a [Bt, 1] int32 leaves the chip instead of the full Q block.


def prepare_params(w1, b1, w2, b2, compute_dtype=jnp.float32):
    """One-time conversion of PyTorch-layout params to the kernel layout.

    Inputs (nn.Linear layout):
      w1: [hidden, obs_dim], b1: [hidden], w2: [action, hidden], b2: [action]
    Returns (w1_t, b1_2d, w2_t, b2_2d):
      w1_t  [obs_dim, hidden_pad]  (hidden zero-padded to a multiple of 128)
      b1_2d [1, hidden_pad]        (f32)
      w2_t  [hidden_pad, act_pad]  (action zero-padded to a multiple of 128)
      b2_2d [1, act_pad]           (f32)
    Padding is exact: padded hidden units are 0 after ReLU and multiply zero
    rows of w2_t; padded action lanes are sliced off in the wrapper.
    """
    hidden, obs_dim = w1.shape
    action_dim = w2.shape[0]
    hid_pad = _round_up(hidden, _LANE)
    act_pad = _round_up(action_dim, _LANE)

    w1_t = jnp.zeros((obs_dim, hid_pad), compute_dtype).at[:, :hidden].set(
        jnp.asarray(w1, compute_dtype).T)
    b1_2d = jnp.zeros((1, hid_pad), jnp.float32).at[:, :hidden].set(
        jnp.asarray(b1, jnp.float32))
    w2_t = jnp.zeros((hid_pad, act_pad), compute_dtype).at[:hidden, :action_dim].set(
        jnp.asarray(w2, compute_dtype).T)
    b2_2d = jnp.zeros((1, act_pad), jnp.float32).at[:, :action_dim].set(
        jnp.asarray(b2, jnp.float32))
    return w1_t, b1_2d, w2_t, b2_2d


@functools.partial(jax.jit, static_argnames=("action_dim", "block_b"))
def dqn_forward(obs, prepared, *, action_dim, block_b=1024):
    """obs: [B, obs_dim]; prepared: output of prepare_params().
    Returns Q: [B, action_dim] in f32."""
    w1_t, b1_2d, w2_t, b2_2d = prepared
    B, obs_dim = obs.shape
    hid_pad = w1_t.shape[1]
    act_pad = w2_t.shape[1]
    compute_dtype = w1_t.dtype

    # Pad batch to a sublane multiple (small path) or to a multiple of the
    # B tile (gridded path).
    if B <= block_b:
        b_pad = _round_up(max(B, 1), _SUBLANE)
    else:
        b_pad = _round_up(B, block_b)

    obs_f = jnp.asarray(obs, compute_dtype)
    if b_pad != B:
        obs_f = jnp.zeros((b_pad, obs_dim), compute_dtype).at[:B].set(obs_f)

    if b_pad <= block_b:
        # Single block, no grid: no pipeline prologue, no double-buffering;
        # everything is resident in VMEM for the duration of the kernel.
        q_pad = pl.pallas_call(
            _dqn_forward_kernel,
            out_shape=jax.ShapeDtypeStruct((b_pad, act_pad), jnp.float32),
            in_specs=[pl.BlockSpec(memory_space=pltpu.MemorySpace.VMEM)] * 5,
            out_specs=pl.BlockSpec(memory_space=pltpu.MemorySpace.VMEM),
        )(obs_f, w1_t, b1_2d, w2_t, b2_2d)
    else:
        # Large replay batches: tile over B; batch axis is "parallel" so it can
        # be sharded across TensorCores (v7x has 2 TCs). Weights use constant
        # index_maps so they are not re-fetched per tile. block_b <= ~2048
        # keeps the per-tile VMEM footprint well under v7x's 64 MiB.
        grid = (b_pad // block_b,)
        q_pad = pl.pallas_call(
            _dqn_forward_kernel,
            out_shape=jax.ShapeDtypeStruct((b_pad, act_pad), jnp.float32),
            grid=grid,
            in_specs=[
                pl.BlockSpec((block_b, obs_dim), lambda i: (i, 0)),
                pl.BlockSpec((obs_dim, hid_pad), lambda i: (0, 0)),
                pl.BlockSpec((1, hid_pad), lambda i: (0, 0)),
                pl.BlockSpec((hid_pad, act_pad), lambda i: (0, 0)),
                pl.BlockSpec((1, act_pad), lambda i: (0, 0)),
            ],
            out_specs=pl.BlockSpec((block_b, act_pad), lambda i: (i, 0)),
            compiler_params=pltpu.CompilerParams(
                dimension_semantics=("parallel",),
                vmem_limit_bytes=64 * 1024 * 1024,
            ),
        )(obs_f, w1_t, b1_2d, w2_t, b2_2d)

    return q_pad[:B, :action_dim]


def init_params(key, obs_dim, hidden_dim, action_dim):
    """Deterministic synthetic init mirroring nn.Linear shapes:
    fc1.weight [hidden, obs_dim], fc1.bias [hidden],
    fc2.weight [action, hidden],  fc2.bias [action]."""
    k1, k2, k3, k4 = jax.random.split(key, 4)
    bound1 = 1.0 / jnp.sqrt(obs_dim)
    bound2 = 1.0 / jnp.sqrt(hidden_dim)
    w1 = jax.random.uniform(k1, (hidden_dim, obs_dim), jnp.float32, -bound1, bound1)
    b1 = jax.random.uniform(k2, (hidden_dim,), jnp.float32, -bound1, bound1)
    w2 = jax.random.uniform(k3, (action_dim, hidden_dim), jnp.float32, -bound2, bound2)
    b2 = jax.random.uniform(k4, (action_dim,), jnp.float32, -bound2, bound2)
    return w1, b1, w2, b2


if __name__ == "__main__":
    # Small shapes consistent with the module: obs_dim=16, hidden_dim=32,
    # action_dim=8, batch=2.
    batch, obs_dim, hidden_dim, action_dim = 2, 16, 32, 8

    key = jax.random.PRNGKey(0)
    k_obs, k_params = jax.random.split(key)
    obs = jax.random.normal(k_obs, (batch, obs_dim), jnp.float32)
    w1, b1, w2, b2 = init_params(k_params, obs_dim, hidden_dim, action_dim)

    # One-time layout conversion (transpose + bias reshape + lane padding).
    # For large-batch v6e/v7x inference, pass compute_dtype=jnp.bfloat16 here.
    prepared = prepare_params(w1, b1, w2, b2, compute_dtype=jnp.float32)

    q_values = dqn_forward(obs, prepared, action_dim=action_dim)
    jax.block_until_ready(q_values)

    # Cross-check against a pure-JAX reference of the PyTorch forward semantics.
    ref = jnp.maximum(obs @ w1.T + b1, 0.0) @ w2.T + b2
    assert q_values.shape == (batch, action_dim)
    assert jnp.allclose(q_values, ref, atol=1e-5, rtol=1e-5)

    # Extra check: non-multiple-of-8 batch exercises the batch-padding path.
    obs_37 = jax.random.normal(jax.random.PRNGKey(1), (37, obs_dim), jnp.float32)
    q_37 = dqn_forward(obs_37, prepared, action_dim=action_dim)
    jax.block_until_ready(q_37)
    ref_37 = jnp.maximum(obs_37 @ w1.T + b1, 0.0) @ w2.T + b2
    assert q_37.shape == (37, action_dim)
    assert jnp.allclose(q_37, ref_37, atol=1e-5, rtol=1e-5)

    # TODO(synk): gradientDescend (Adam update / MSE-L1 loss / grad clipping) is
    # training-side logic, not part of the forward pass.
    print("KERNEL_OK")
</pallas_src>

<mosaic_0001>
module attributes {stable_mosaic.version = 11 : i64} {
  func.func @_dqn_forward_kernel(%arg0: memref<8x16xf32, #tpu.memory_space<vmem>>, %arg1: memref<16x128xf32, #tpu.memory_space<vmem>>, %arg2: memref<1x128xf32, #tpu.memory_space<vmem>>, %arg3: memref<128x128xf32, #tpu.memory_space<vmem>>, %arg4: memref<1x128xf32, #tpu.memory_space<vmem>>, %arg5: memref<8x128xf32, #tpu.memory_space<vmem>>) attributes {dimension_semantics = [], scalar_prefetch = 0 : i64, scratch_operands = 0 : i64, tpu.core_type = #tpu.core_type<tc>} {
    %c0 = arith.constant 0 : index
    %c0_0 = arith.constant 0 : index
    %0 = vector.load %arg0[%c0, %c0_0] : memref<8x16xf32, #tpu.memory_space<vmem>>, vector<8x16xf32>
    %c0_1 = arith.constant 0 : index
    %c0_2 = arith.constant 0 : index
    %1 = vector.load %arg1[%c0_1, %c0_2] : memref<16x128xf32, #tpu.memory_space<vmem>>, vector<16x128xf32>
    %cst = arith.constant dense<0.000000e+00> : vector<8x128xf32>
    %2 = tpu.matmul %0, %1, %cst {dimension_numbers = #tpu.dot_dimension_numbers<[1], [0], [0], [1], [0, 0, 1, 1], [], []>} : vector<8x16xf32>, vector<16x128xf32>, vector<8x128xf32> -> vector<8x128xf32>
    %c0_3 = arith.constant 0 : index
    %c0_4 = arith.constant 0 : index
    %3 = vector.load %arg2[%c0_3, %c0_4] : memref<1x128xf32, #tpu.memory_space<vmem>>, vector<1x128xf32>
    %4 = vector.broadcast %3 : vector<1x128xf32> to vector<8x128xf32>
    %5 = arith.addf %2, %4 : vector<8x128xf32>
    %cst_5 = arith.constant 0.000000e+00 : f32
    %6 = vector.broadcast %cst_5 : f32 to vector<8x128xf32>
    %7 = arith.maximumf %5, %6 : vector<8x128xf32>
    %c0_6 = arith.constant 0 : index
    %c0_7 = arith.constant 0 : index
    %8 = vector.load %arg3[%c0_6, %c0_7] : memref<128x128xf32, #tpu.memory_space<vmem>>, vector<128x128xf32>
    %cst_8 = arith.constant dense<0.000000e+00> : vector<8x128xf32>
    %9 = tpu.matmul %7, %8, %cst_8 {dimension_numbers = #tpu.dot_dimension_numbers<[1], [0], [0], [1], [0, 0, 1, 1], [], []>} : vector<8x128xf32>, vector<128x128xf32>, vector<8x128xf32> -> vector<8x128xf32>
    %c0_9 = arith.constant 0 : index
    %c0_10 = arith.constant 0 : index
    %10 = vector.load %arg4[%c0_9, %c0_10] : memref<1x128xf32, #tpu.memory_space<vmem>>, vector<1x128xf32>
    %11 = vector.broadcast %10 : vector<1x128xf32> to vector<8x128xf32>
    %12 = arith.addf %9, %11 : vector<8x128xf32>
    %c0_11 = arith.constant 0 : index
    %c0_12 = arith.constant 0 : index
    %13 = vector.load %arg5[%c0_11, %c0_12] : memref<8x128xf32, #tpu.memory_space<vmem>>, vector<8x128xf32>
    tpu.vector_store %arg5[%c0_11, %c0_12], %12 {strides = array<i32>} : memref<8x128xf32, #tpu.memory_space<vmem>>, vector<8x128xf32>,
    return
  }
}

</mosaic_0001>

<llo_original>
// kernel: dqn_forward.1
$region0: #{dqn_forward.1}
  #allocation0 [shape = 'u32[]', space=smem, size = 0x4, offset = 0x4, fixed_abs, tag = 'smem constant byte address 0x4 - core index']
  #allocation1 [shape = 'u32[72,128]{1,0:T(1,128)}', space=vmem, size = 0x9000, scoped, tag = 'internal scratch']
  %s0 = inlined_call_operand.vmem [shape: f32[8,16], index: 0, kind: input, shape index: {}]
  %s1 = inlined_call_operand.hbm [shape: f32[16,128], index: 1, kind: input, shape index: {}]
  %s2 = inlined_call_operand.vmem [shape: f32[1,128], index: 2, kind: input, shape index: {}]
  %s3 = inlined_call_operand.hbm [shape: f32[128,128], index: 3, kind: input, shape index: {}]
  %s4 = inlined_call_operand.vmem [shape: f32[1,128], index: 4, kind: input, shape index: {}]
  %s5 = inlined_call_operand.vmem [shape: f32[8,128], index: 5, kind: output, shape index: {}]
  %s6 = sld [smem:[#allocation0]]
  $region38: #{dqn_forward.1} parent=0
    _
  %s8 = ssub.s32 1, %s6
  %s9 = scalar_select 0, %s8, %s6
  $region1: #{dqn_forward.1} parent=0
    #allocation2 [shape = 'u8[8192]{0}', space=vmem, size = 0x2000, scoped, tag = 'input window, operand 1, single buffered']
    #allocation3 [shape = 's32[1]{0}', space=sflag, size = 0x4, scoped, tag = 'scoped memory for dqn_forward.1']
    #allocation4 [shape = 'u8[65536]{0}', space=vmem, size = 0x10000, scoped, tag = 'input window, operand 3, single buffered']
    #allocation5 [shape = 's32[1]{0}', space=sflag, size = 0x4, scoped, tag = 'scoped memory for dqn_forward.1']
    %10 = vsyncpa [#allocation3], 0
    %11 = vsyncpa [#allocation5], 0
    // Predicated region
    $region2: #{dqn_forward.1} parent=1 // pred_check
      _
    $region3: #{dqn_forward.1} parent=1 // pred_check_branch
      %13 = sbr.rel (0) target = $region5
    $region4: #{dqn_forward.1} parent=1 // pred_region
      _
    $region5: #{dqn_forward.1} parent=1 // pred_fallthru
      _
    // Predicated region
    $region6: #{dqn_forward.1} parent=1 // pred_check
      _
    $region7: #{dqn_forward.1} parent=1 // pred_check_branch
      %15 = sbr.rel (0) target = $region9
    $region8: #{dqn_forward.1} parent=1 // pred_region
      %17 = vsyncadd [#allocation3], 0
      %s18 = sshll.u32 %s1, 4
      %s19 = int_to_ptr.hbm [resolvable:$true] %s18
      %s20 = sshll.u32 [#allocation2], 4
      %s21 = int_to_ptr.vmem [resolvable:$true] %s20
      %26 = dma.hbm_to_vmem [thread:$0]  %s19, 256, %s21, [#allocation3], 128, 128, 8
    $region9: #{dqn_forward.1} parent=1 // pred_fallthru
      _
    // Predicated region
    $region10: #{dqn_forward.1} parent=1 // pred_check
      _
    $region11: #{dqn_forward.1} parent=1 // pred_check_branch
      %28 = sbr.rel (0) target = $region13
    $region12: #{dqn_forward.1} parent=1 // pred_region
      _
    $region13: #{dqn_forward.1} parent=1 // pred_fallthru
      _
    // Predicated region
    $region14: #{dqn_forward.1} parent=1 // pred_check
      _
    $region15: #{dqn_forward.1} parent=1 // pred_check_branch
      %30 = sbr.rel (0) target = $region17
    $region16: #{dqn_forward.1} parent=1 // pred_region
      %32 = vsyncadd [#allocation5], 0
      %s33 = sshll.u32 %s3, 4
      %s34 = int_to_ptr.hbm [resolvable:$true] %s33
      %s35 = sshll.u32 [#allocation4], 4
      %s36 = int_to_ptr.vmem [resolvable:$true] %s35
      %41 = dma.hbm_to_vmem [thread:$0]  %s34, 2048, %s36, [#allocation5], 128, 128, 8
    $region17: #{dqn_forward.1} parent=1 // pred_fallthru
      _
    // Predicated region
    $region18: #{dqn_forward.1} parent=1 // pred_check
      _
    $region19: #{dqn_forward.1} parent=1 // pred_check_branch
      %43 = sbr.rel (0) target = $region21
    $region20: #{dqn_forward.1} parent=1 // pred_region
      _
    $region21: #{dqn_forward.1} parent=1 // pred_fallthru
      _
    // Predicated region
    $region22: #{dqn_forward.1} parent=1 // pred_check
      _
    $region23: #{dqn_forward.1} parent=1 // pred_check_branch
      %45 = sbr.rel (0) target = $region25
    $region24: #{dqn_forward.1} parent=1 // pred_region
      %47 = dma.done [#allocation3], 256
    $region25: #{dqn_forward.1} parent=1 // pred_fallthru
      _
    // Predicated region
    $region26: #{dqn_forward.1} parent=1 // pred_check
      _
    $region27: #{dqn_forward.1} parent=1 // pred_check_branch
      %49 = sbr.rel (0) target = $region29
    $region28: #{dqn_forward.1} parent=1 // pred_region
      %51 = dma.done [#allocation5], 2048
    $region29: #{dqn_forward.1} parent=1 // pred_fallthru
      _
    %v52 = vld [vmem:[%s0] sm:$0xff]
    %v53 = vld [vmem:[#allocation2] sm:$0xff]
    %v54 = vld [vmem:[#allocation2 + $0x8] sm:$0xff]
    %v55 = vld [vmem:[%s2] sm:$0x1]
    %v57 = vperm.slane %v55, 0
    %vm59 = vcmask 130048
    %v61 = vsel %vm59, %v52, 0
    %63 = vmatpush.msra.mxu0 0.0
    %64 = vmatpush.msra.mxu0 0.0
    %65 = vmatpush.msra.mxu0 0.0
    %66 = vmatpush.msra.mxu0 0.0
    %67 = vmatpush.msra.mxu0 0.0
    %68 = vmatpush.msra.mxu0 0.0
    %69 = vmatpush.msra.mxu0 0.0
    %70 = vmatpush.msra.mxu0 0.0
    %71 = vmatpush.msra.mxu0 0.0
    %72 = vmatpush.msra.mxu0 0.0
    %73 = vmatpush.msra.mxu0 0.0
    %74 = vmatpush.msra.mxu0 0.0
    %75 = vmatpush.msra.mxu0 0.0
    %76 = vmatpush.msra.mxu0 0.0
    %77 = vmatpush.msra.mxu0 %v54
    %78 = vmatpush.msra.mxu0 %v53
    %79 = vmatmul.f32.gmra.mxu0 %v61
    %v80 = vpop.f32.mrf.mxu0
    %v81 = vadd.f32 %v57, %v80
    %82 = vdwg.mxu0
    %v83 = vmax.f32 %v81, 0.0
    %v84 = vld [vmem:[#allocation4] sm:$0xff]
    %v85 = vld [vmem:[#allocation4 + $0x8] sm:$0xff]
    %v86 = vld [vmem:[#allocation4 + $0x10] sm:$0xff]
    %v87 = vld [vmem:[#allocation4 + $0x18] sm:$0xff]
    %v88 = vld [vmem:[#allocation4 + $0x20] sm:$0xff]
    %v89 = vld [vmem:[#allocation4 + $0x28] sm:$0xff]
    %v90 = vld [vmem:[#allocation4 + $0x30] sm:$0xff]
    %v91 = vld [vmem:[#allocation4 + $0x38] sm:$0xff]
    %v92 = vld [vmem:[#allocation4 + $0x40] sm:$0xff]
    %v93 = vld [vmem:[#allocation4 + $0x48] sm:$0xff]
    %v94 = vld [vmem:[#allocation4 + $0x50] sm:$0xff]
    %v95 = vld [vmem:[#allocation4 + $0x58] sm:$0xff]
    %v96 = vld [vmem:[#allocation4 + $0x60] sm:$0xff]
    %v97 = vld [vmem:[#allocation4 + $0x68] sm:$0xff]
    %v98 = vld [vmem:[#allocation4 + $0x70] sm:$0xff]
    %v99 = vld [vmem:[#allocation4 + $0x78] sm:$0xff]
    %v100 = vld [vmem:[%s4] sm:$0x1]
    %v102 = vperm.slane %v100, 0
    %104 = vmatpush.msra.mxu0 %v99
    %105 = vmatpush.msra.mxu0 %v98
    %106 = vmatpush.msra.mxu0 %v97
    %107 = vmatpush.msra.mxu0 %v96
    %108 = vmatpush.msra.mxu0 %v95
    %109 = vmatpush.msra.mxu0 %v94
    %110 = vmatpush.msra.mxu0 %v93
    %111 = vmatpush.msra.mxu0 %v92
    %112 = vmatpush.msra.mxu0 %v91
    %113 = vmatpush.msra.mxu0 %v90
    %114 = vmatpush.msra.mxu0 %v89
    %115 = vmatpush.msra.mxu0 %v88
    %116 = vmatpush.msra.mxu0 %v87
    %117 = vmatpush.msra.mxu0 %v86
    %118 = vmatpush.msra.mxu0 %v85
    %119 = vmatpush.msra.mxu0 %v84
    %120 = vmatmul.f32.gmra.mxu0 %v83
    %v121 = vpop.f32.mrf.mxu0
    %v122 = vadd.f32 %v102, %v121
    %123 = vdwg.mxu0
    %124 = vst [vmem:[%s5] sm:$0xff] %v122
    // Predicated region
    $region30: #{dqn_forward.1} parent=1 // pred_check
      _
    $region31: #{dqn_forward.1} parent=1 // pred_check_branch
      %126 = sbr.rel (0) target = $region33
    $region32: #{dqn_forward.1} parent=1 // pred_region
      _
    $region33: #{dqn_forward.1} parent=1 // pred_fallthru
      _
    // Predicated region
    $region34: #{dqn_forward.1} parent=1 // pred_check
      _
    $region35: #{dqn_forward.1} parent=1 // pred_check_branch
      %128 = sbr.rel (0) target = $region37
    $region36: #{dqn_forward.1} parent=1 // pred_region
      _
    $region37: #{dqn_forward.1} parent=1 // pred_fallthru
      _
    %129 = vsyncpa [#allocation3], 1
    %130 = vsyncpa [#allocation5], 1

</llo_original>
